<compile_context>
chip_gen: v6e
topology: v6e:2x2x1
jax: 0.10.0
libtpu: 0.0.40
codegen_flags: <defaults>
</compile_context>

<pallas_src>
import functools

import jax
import jax.numpy as jnp
from jax.experimental import pallas as pl
from jax.experimental.pallas import tpu as pltpu


def _round_up(x, m):
    return ((x + m - 1) // m) * m


def _vmem_capacity_bytes():
    """Per-core VMEM capacity; conservative 64 MiB (v7x per-TC) fallback."""
    try:
        info = pltpu.get_tpu_info()
        cap = getattr(info, "vmem_capacity_bytes", None)
        if cap:
            return int(cap)
    except Exception:
        pass
    return 64 * 1024 * 1024


def _layernorm_epilogue(h, g_ref, beta_ref, o_ref, eps):
    """f32 LayerNorm over the hidden (lane) axis + affine, cast to output dtype."""
    mean = jnp.mean(h, axis=-1, keepdims=True)
    centered = h - mean
    var = jnp.mean(centered * centered, axis=-1, keepdims=True)
    inv = jax.lax.rsqrt(var + eps)
    out = centered * inv * g_ref[...].astype(jnp.float32) + beta_ref[...].astype(jnp.float32)
    o_ref[...] = out.astype(o_ref.dtype)


def _bert_output_kernel(x_ref, w_ref, b_ref, res_ref, g_ref, beta_ref, o_ref, *, eps):
    """Resident-weight path: one grid axis over row tiles, full (I, H) weight in VMEM."""
    # In-kernel cast to bf16 (VPU filler, free in the memory-bound regime); MXU accumulates in f32.
    h = jnp.dot(x_ref[...].astype(jnp.bfloat16), w_ref[...].astype(jnp.bfloat16),
                preferred_element_type=jnp.float32)
    # TODO(synk): dropout is eval-mode identity; training mode needs pltpu.prng_* masking here.
    h = h + b_ref[...].astype(jnp.float32) + res_ref[...].astype(jnp.float32)
    _layernorm_epilogue(h, g_ref, beta_ref, o_ref, eps)


def _bert_output_kernel_ktiled(x_ref, w_ref, b_ref, res_ref, g_ref, beta_ref, o_ref, acc_ref, *,
                               eps):
    """Fallback path for weights too large to keep VMEM-resident: K grid axis + f32 accumulator."""
    k = pl.program_id(1)

    @pl.when(k == 0)
    def _():
        acc_ref[...] = jnp.zeros_like(acc_ref)

    acc_ref[...] += jnp.dot(x_ref[...].astype(jnp.bfloat16), w_ref[...].astype(jnp.bfloat16),
                            preferred_element_type=jnp.float32)

    @pl.when(k == pl.num_programs(1) - 1)
    def _():
        # TODO(synk): dropout is eval-mode identity; training mode needs pltpu.prng_* masking here.
        h = acc_ref[...] + b_ref[...].astype(jnp.float32) + res_ref[...].astype(jnp.float32)
        _layernorm_epilogue(h, g_ref, beta_ref, o_ref, eps)


def bert_output(hidden_states, input_tensor, params, *, eps=1e-12, tm=None, tk=None,
                weight_resident=None, mxu_dtype=jnp.bfloat16):
    """hidden_states: [B, S, I]; input_tensor (residual): [B, S, H] -> [B, S, H]."""
    w, b, gamma, beta = params["w"], params["b"], params["gamma"], params["beta"]
    B, S, I = hidden_states.shape
    H = input_tensor.shape[-1]
    M = B * S
    out_dtype = input_tensor.dtype

    # Reshapes only (no dtype copies of the big tensors); parameter-sized casts are cheap/one-time
    # (and no-ops for models whose weights are already bf16).
    x2 = hidden_states.reshape(M, I)
    r2 = input_tensor.reshape(M, H)
    w_c = w.astype(mxu_dtype)
    b2 = b.reshape(1, H).astype(jnp.float32)
    g2 = gamma.reshape(1, H).astype(jnp.float32)
    beta2 = beta.reshape(1, H).astype(jnp.float32)

    x_bytes = jnp.dtype(x2.dtype).itemsize
    r_bytes = jnp.dtype(r2.dtype).itemsize
    o_bytes = jnp.dtype(out_dtype).itemsize
    w_elem_bytes = jnp.dtype(mxu_dtype).itemsize
    small_vecs = 6 * 8 * _round_up(H, 128) * 4     # bias/gamma/beta VMEM footprint (generous)

    # Per-device VMEM plan: buffers must fit a 75%-of-capacity budget; compiler cap at 90%.
    vmem_cap = _vmem_capacity_bytes()
    vmem_budget = int(vmem_cap * 0.75)
    vmem_limit = int(vmem_cap * 0.90)

    w_bytes_total = I * H * w_elem_bytes
    if weight_resident is None:
        weight_resident = w_bytes_total <= vmem_budget // 3

    if weight_resident:
        if tm is None:
            fixed = w_bytes_total + small_vecs      # weight is single-buffered (Buffered(1))
            per_row = 2 * I * x_bytes + 2 * H * r_bytes + 2 * H * o_bytes
            tm = 8
            for cand in (1024, 512, 256, 128, 64, 32, 16, 8):
                if fixed + cand * per_row <= vmem_budget:
                    tm = cand
                    break
        tk_eff = I
    else:
        # K tile must divide I exactly (a ragged K tile would corrupt the accumulation).
        tk_eff = tk if tk is not None else I
        if tk is None:
            for cand in (2048, 1024, 512, 256, 128):
                if I % cand == 0:
                    tk_eff = cand
                    break
        if I % tk_eff != 0:
            tk_eff = I
        if tm is None:
            tm = 8
            for cand in (1024, 512, 256, 128, 64, 32, 16, 8):
                need = (2 * cand * tk_eff * x_bytes + 2 * tk_eff * H * w_elem_bytes
                        + 2 * cand * H * r_bytes + 2 * cand * H * o_bytes
                        + cand * H * 4 + small_vecs)
                if need <= vmem_budget:
                    tm = cand
                    break

    # Keep the tile no bigger than needed; prefer >= 2 row tiles when M allows (megacore + overlap).
    if M >= 16:
        tm_eff = min(tm, max(8, _round_up((M + 1) // 2, 8)))
    else:
        tm_eff = min(tm, _round_up(M, 8))
    tm_eff = max(tm_eff, 8)
    num_row_tiles = (M + tm_eff - 1) // tm_eff      # ragged last tile is masked by Pallas

    if weight_resident:
        kernel = functools.partial(_bert_output_kernel, eps=eps)
        resident = pl.Buffered(1)                    # constant index_map => single buffer suffices
        in_specs = [
            pl.BlockSpec((tm_eff, I), lambda i: (i, 0)),                          # activations
            pl.BlockSpec((I, H), lambda i: (0, 0), pipeline_mode=resident),       # weight (bf16)
            pl.BlockSpec((1, H), lambda i: (0, 0), pipeline_mode=resident),       # bias
            pl.BlockSpec((tm_eff, H), lambda i: (i, 0)),                          # residual
            pl.BlockSpec((1, H), lambda i: (0, 0), pipeline_mode=resident),       # gamma
            pl.BlockSpec((1, H), lambda i: (0, 0), pipeline_mode=resident),       # beta
        ]
        out_specs = pl.BlockSpec((tm_eff, H), lambda i: (i, 0))
        grid = (num_row_tiles,)
        dims = ("parallel",)
        scratch = []
    else:
        kernel = functools.partial(_bert_output_kernel_ktiled, eps=eps)
        nk = I // tk_eff
        in_specs = [
            pl.BlockSpec((tm_eff, tk_eff), lambda i, k: (i, k)),                  # activations
            pl.BlockSpec((tk_eff, H), lambda i, k: (k, 0)),                       # weight tiles
            pl.BlockSpec((1, H), lambda i, k: (0, 0)),                            # bias
            pl.BlockSpec((tm_eff, H), lambda i, k: (i, 0)),                       # residual
            pl.BlockSpec((1, H), lambda i, k: (0, 0)),                            # gamma
            pl.BlockSpec((1, H), lambda i, k: (0, 0)),                            # beta
        ]
        out_specs = pl.BlockSpec((tm_eff, H), lambda i, k: (i, 0))
        grid = (num_row_tiles, nk)
        dims = ("parallel", "arbitrary")
        scratch = [pltpu.VMEM((tm_eff, H), jnp.float32)]

    out = pl.pallas_call(
        kernel,
        out_shape=jax.ShapeDtypeStruct((M, H), out_dtype),
        grid_spec=pltpu.PrefetchScalarGridSpec(
            num_scalar_prefetch=0,
            grid=grid,
            in_specs=in_specs,
            out_specs=out_specs,
            scratch_shapes=scratch),
        compiler_params=pltpu.CompilerParams(
            dimension_semantics=dims,
            vmem_limit_bytes=vmem_limit),
    )(x2, w_c, b2, r2, g2, beta2)

    return out.reshape(B, S, H)


def bert_output_ref(hidden_states, input_tensor, params, *, eps=1e-12, mxu_dtype=jnp.bfloat16):
    """Pure-JAX reference matching the PyTorch module in eval mode, with the same
    bf16-input / f32-accumulate matmul dtype policy as the kernel."""
    h = jnp.dot(hidden_states.astype(mxu_dtype), params["w"].astype(mxu_dtype),
                preferred_element_type=jnp.float32)
    h = h + params["b"].astype(jnp.float32) + input_tensor.astype(jnp.float32)
    mean = jnp.mean(h, axis=-1, keepdims=True)
    var = jnp.mean((h - mean) ** 2, axis=-1, keepdims=True)
    normed = (h - mean) * jax.lax.rsqrt(var + eps)
    out = normed * params["gamma"].astype(jnp.float32) + params["beta"].astype(jnp.float32)
    return out.astype(input_tensor.dtype)


if __name__ == "__main__":
    # Small shapes consistent with BERTOutput: intermediate=512, hidden=256, batch=2, seq=8.
    B, S, I, H = 2, 8, 512, 256
    key = jax.random.PRNGKey(0)
    k1, k2, k3, k4 = jax.random.split(key, 4)

    hidden_states = jax.random.normal(k1, (B, S, I), dtype=jnp.float32)
    input_tensor = jax.random.normal(k2, (B, S, H), dtype=jnp.float32)

    # Deterministic parameter init (nn.Linear-style uniform; LayerNorm gamma=1, beta=0).
    bound = 1.0 / jnp.sqrt(I)
    params = {
        "w": jax.random.uniform(k3, (I, H), jnp.float32, -bound, bound),  # dense weight (in, out)
        "b": jax.random.uniform(k4, (H,), jnp.float32, -bound, bound),    # dense bias
        "gamma": jnp.ones((H,), jnp.float32),
        "beta": jnp.zeros((H,), jnp.float32),
    }

    ref = bert_output_ref(hidden_states, input_tensor, params)

    # Main (resident-weight) path.
    out = jax.block_until_ready(bert_output(hidden_states, input_tensor, params))
    assert out.shape == (B, S, H)
    assert jnp.allclose(out, ref, atol=2e-2, rtol=2e-2), "resident-weight path mismatch"

    # Forced K-tiled fallback path (exercises the accumulator / pl.when init-finalize logic).
    out_kt = jax.block_until_ready(
        bert_output(hidden_states, input_tensor, params, weight_resident=False, tk=128))
    assert out_kt.shape == (B, S, H)
    assert jnp.allclose(out_kt, ref, atol=2e-2, rtol=2e-2), "K-tiled fallback path mismatch"

    print("KERNEL_OK")
</pallas_src>

<mosaic_0001>
module attributes {stable_mosaic.version = 11 : i64} {
  func.func @_bert_output_kernel(%arg0: i32, %arg1: memref<8x512xf32, #tpu.memory_space<vmem>>, %arg2: memref<512x256xbf16, #tpu.memory_space<vmem>>, %arg3: memref<1x256xf32, #tpu.memory_space<vmem>>, %arg4: memref<8x256xf32, #tpu.memory_space<vmem>>, %arg5: memref<1x256xf32, #tpu.memory_space<vmem>>, %arg6: memref<1x256xf32, #tpu.memory_space<vmem>>, %arg7: memref<8x256xf32, #tpu.memory_space<vmem>>) attributes {dimension_semantics = [#tpu.dimension_semantics<parallel>], iteration_bounds = array<i64: 2>, scalar_prefetch = 0 : i64, scratch_operands = 0 : i64, tpu.core_type = #tpu.core_type<tc>, window_params = [{transform_indices = @transform_0, window_bounds = array<i64: 8, 512>}, {pipeline_mode = #tpu.pipeline_mode<synchronous>, transform_indices = @transform_1, window_bounds = array<i64: 512, 256>}, {pipeline_mode = #tpu.pipeline_mode<synchronous>, transform_indices = @transform_2, window_bounds = array<i64: 1, 256>}, {transform_indices = @transform_3, window_bounds = array<i64: 8, 256>}, {pipeline_mode = #tpu.pipeline_mode<synchronous>, transform_indices = @transform_4, window_bounds = array<i64: 1, 256>}, {pipeline_mode = #tpu.pipeline_mode<synchronous>, transform_indices = @transform_5, window_bounds = array<i64: 1, 256>}, {transform_indices = @transform_6, window_bounds = array<i64: 8, 256>}]} {
    %c0 = arith.constant 0 : index
    %c0_0 = arith.constant 0 : index
    %0 = vector.load %arg1[%c0, %c0_0] : memref<8x512xf32, #tpu.memory_space<vmem>>, vector<8x512xf32>
    %1 = arith.truncf %0 : vector<8x512xf32> to vector<8x512xbf16>
    %c0_1 = arith.constant 0 : index
    %c0_2 = arith.constant 0 : index
    %2 = vector.load %arg2[%c0_1, %c0_2] : memref<512x256xbf16, #tpu.memory_space<vmem>>, vector<512x256xbf16>
    %cst = arith.constant dense<0.000000e+00> : vector<8x256xf32>
    %3 = tpu.matmul %1, %2, %cst {dimension_numbers = #tpu.dot_dimension_numbers<[1], [0], [0], [1], [0, 0, 1, 1], [], []>} : vector<8x512xbf16>, vector<512x256xbf16>, vector<8x256xf32> -> vector<8x256xf32>
    %c0_3 = arith.constant 0 : index
    %c0_4 = arith.constant 0 : index
    %4 = vector.load %arg3[%c0_3, %c0_4] : memref<1x256xf32, #tpu.memory_space<vmem>>, vector<1x256xf32>
    %5 = vector.broadcast %4 : vector<1x256xf32> to vector<8x256xf32>
    %6 = arith.addf %3, %5 : vector<8x256xf32>
    %c0_5 = arith.constant 0 : index
    %c0_6 = arith.constant 0 : index
    %7 = vector.load %arg4[%c0_5, %c0_6] : memref<8x256xf32, #tpu.memory_space<vmem>>, vector<8x256xf32>
    %8 = arith.addf %6, %7 : vector<8x256xf32>
    %cst_7 = arith.constant dense<0.000000e+00> : vector<8xf32>
    %9 = vector.multi_reduction <add>, %8, %cst_7 [1] : vector<8x256xf32> to vector<8xf32>
    %10 = vector.shape_cast %9 : vector<8xf32> to vector<8x1xf32>
    %cst_8 = arith.constant 2.560000e+02 : f32
    %11 = vector.broadcast %cst_8 : f32 to vector<8x1xf32>
    %12 = arith.divf %10, %11 : vector<8x1xf32>
    %13 = vector.broadcast %12 : vector<8x1xf32> to vector<8x256xf32>
    %14 = arith.subf %8, %13 : vector<8x256xf32>
    %15 = arith.mulf %14, %14 : vector<8x256xf32>
    %cst_9 = arith.constant dense<0.000000e+00> : vector<8xf32>
    %16 = vector.multi_reduction <add>, %15, %cst_9 [1] : vector<8x256xf32> to vector<8xf32>
    %17 = vector.shape_cast %16 : vector<8xf32> to vector<8x1xf32>
    %cst_10 = arith.constant 2.560000e+02 : f32
    %18 = vector.broadcast %cst_10 : f32 to vector<8x1xf32>
    %19 = arith.divf %17, %18 : vector<8x1xf32>
    %cst_11 = arith.constant 9.99999996E-13 : f32
    %20 = vector.broadcast %cst_11 : f32 to vector<8x1xf32>
    %21 = arith.addf %19, %20 : vector<8x1xf32>
    %22 = math.rsqrt %21 : vector<8x1xf32>
    %23 = vector.broadcast %22 : vector<8x1xf32> to vector<8x256xf32>
    %24 = arith.mulf %14, %23 : vector<8x256xf32>
    %c0_12 = arith.constant 0 : index
    %c0_13 = arith.constant 0 : index
    %25 = vector.load %arg5[%c0_12, %c0_13] : memref<1x256xf32, #tpu.memory_space<vmem>>, vector<1x256xf32>
    %26 = vector.broadcast %25 : vector<1x256xf32> to vector<8x256xf32>
    %27 = arith.mulf %24, %26 : vector<8x256xf32>
    %c0_14 = arith.constant 0 : index
    %c0_15 = arith.constant 0 : index
    %28 = vector.load %arg6[%c0_14, %c0_15] : memref<1x256xf32, #tpu.memory_space<vmem>>, vector<1x256xf32>
    %29 = vector.broadcast %28 : vector<1x256xf32> to vector<8x256xf32>
    %30 = arith.addf %27, %29 : vector<8x256xf32>
    %c0_16 = arith.constant 0 : index
    %c0_17 = arith.constant 0 : index
    %31 = vector.load %arg7[%c0_16, %c0_17] : memref<8x256xf32, #tpu.memory_space<vmem>>, vector<8x256xf32>
    tpu.vector_store %arg7[%c0_16, %c0_17], %30 {strides = array<i32>} : memref<8x256xf32, #tpu.memory_space<vmem>>, vector<8x256xf32>,
    return
  }
  func.func @transform_0(%arg0: i32) -> (i32, i32) {
    %c0_i32 = arith.constant 0 : i32
    %c0_i32_0 = arith.constant 0 : i32
    return %arg0, %c0_i32 : i32, i32
  }
  func.func @transform_1(%arg0: i32) -> (i32, i32) {
    %c0_i32 = arith.constant 0 : i32
    %c0_i32_0 = arith.constant 0 : i32
    %c0_i32_1 = arith.constant 0 : i32
    return %c0_i32, %c0_i32_0 : i32, i32
  }
  func.func @transform_2(%arg0: i32) -> (i32, i32) {
    %c0_i32 = arith.constant 0 : i32
    %c0_i32_0 = arith.constant 0 : i32
    %c0_i32_1 = arith.constant 0 : i32
    return %c0_i32, %c0_i32_0 : i32, i32
  }
  func.func @transform_3(%arg0: i32) -> (i32, i32) {
    %c0_i32 = arith.constant 0 : i32
    %c0_i32_0 = arith.constant 0 : i32
    return %arg0, %c0_i32 : i32, i32
  }
  func.func @transform_4(%arg0: i32) -> (i32, i32) {
    %c0_i32 = arith.constant 0 : i32
    %c0_i32_0 = arith.constant 0 : i32
    %c0_i32_1 = arith.constant 0 : i32
    return %c0_i32, %c0_i32_0 : i32, i32
  }
  func.func @transform_5(%arg0: i32) -> (i32, i32) {
    %c0_i32 = arith.constant 0 : i32
    %c0_i32_0 = arith.constant 0 : i32
    %c0_i32_1 = arith.constant 0 : i32
    return %c0_i32, %c0_i32_0 : i32, i32
  }
  func.func @transform_6(%arg0: i32) -> (i32, i32) {
    %c0_i32 = arith.constant 0 : i32
    %c0_i32_0 = arith.constant 0 : i32
    return %arg0, %c0_i32 : i32, i32
  }
}

</mosaic_0001>

<llo_original>
// kernel: tpu_custom_call.1
$region0: #{tpu_custom_call.1}
  #allocation0 [shape = 'u32[]', space=smem, size = 0x4, offset = 0x4, fixed_abs, tag = 'smem constant byte address 0x4 - core index']
  #allocation1 [shape = 'u32[144,128]{1,0:T(1,128)}', space=vmem, size = 0x12000, scoped, tag = 'internal scratch']
  %s0 = inlined_call_operand.hbm [shape: f32[16,512], index: 0, kind: input, shape index: {}]
  %s1 = inlined_call_operand.hbm [shape: bf16[512,256], index: 1, kind: input, shape index: {}]
  %s2 = inlined_call_operand.vmem [shape: f32[1,256], index: 2, kind: input, shape index: {}]
  %s3 = inlined_call_operand.hbm [shape: f32[16,256], index: 3, kind: input, shape index: {}]
  %s4 = inlined_call_operand.vmem [shape: f32[1,256], index: 4, kind: input, shape index: {}]
  %s5 = inlined_call_operand.vmem [shape: f32[1,256], index: 5, kind: input, shape index: {}]
  %s6 = inlined_call_operand.hbm [shape: f32[16,256], index: 6, kind: output, shape index: {}]
  %s7 = sld [smem:[#allocation0]]
  $region69: #{tpu_custom_call.1} parent=0
    _
  %s9 = ssub.s32 1, %s7
  %s10 = scalar_select 0, %s9, %s7
  $region1: #{tpu_custom_call.1} parent=0
    #allocation2 [shape = 'u8[32768]{0}', space=vmem, size = 0x8000, scoped, tag = 'input window, operand 0']
    #allocation3 [shape = 's32[2]{0}', space=sflag, size = 0x8, scoped, tag = 'scoped memory for tpu_custom_call.1']
    #allocation4 [shape = 's32[2]{0}', space=sflag, size = 0x8, scoped, tag = 'scoped memory for tpu_custom_call.1']
    #allocation5 [shape = 'u8[262144]{0}', space=vmem, size = 0x40000, scoped, tag = 'input window, operand 1, single buffered']
    #allocation6 [shape = 's32[1]{0}', space=sflag, size = 0x4, scoped, tag = 'scoped memory for tpu_custom_call.1']
    #allocation7 [shape = 'u8[16384]{0}', space=vmem, size = 0x4000, scoped, tag = 'input window, operand 3']
    #allocation8 [shape = 'u8[16384]{0}', space=vmem, size = 0x4000, scoped, tag = 'output window, operand 0']
    %11 = vsyncpa [#allocation3], 0
    %s12 = scalar_lea.sflag [#allocation3], 1
    %13 = vsyncpa %s12, 0
    %14 = vsyncpa [#allocation6], 0
    %15 = vsyncpa [#allocation4], 0
    %s16 = scalar_lea.sflag [#allocation4], 1
    %17 = vsyncpa %s16, 0
    loop: start=0, step=1, limit=4
    $region2: #{tpu_custom_call.1} parent=1 // loop_pre_header
      _
    $region3: #{tpu_custom_call.1} parent=1 // loop_header
      %s19 = sphi 0, %s23
      %p20 = scmp.ge.s32.totalorder %s19, 4
      %s29 = sphi 0, %s31
      %s32 = sphi 0, %s29
      %s33 = sphi 0, %s32
      %s49 = sphi 0, %s33
      %s53 = sphi 0, %s53
      %s55 = sphi 0, %s53
      %s56 = sphi 0, %s55
      %s70 = sphi 0, %s56
      %s74 = sphi 0, %s74
      %s76 = sphi 0, %s74
      %s77 = sphi 0, %s76
      %s91 = sphi 0, %s77
      %s97 = sphi 0, %s99
      %s100 = sphi 0, %s97
      %s101 = sphi 0, %s100
      %s117 = sphi 0, %s101
      %s121 = sphi 0, %s121
      %s123 = sphi 0, %s121
      %s124 = sphi 0, %s123
      %s138 = sphi 0, %s124
      %s142 = sphi 0, %s142
      %s144 = sphi 0, %s142
      %s145 = sphi 0, %s144
      %s159 = sphi 0, %s145
      %s165 = sphi 0, %s167
      %s168 = sphi 0, %s165
      %s169 = sphi 0, %s168
      %s185 = sphi 0, %s169
    $region4: #{tpu_custom_call.1} parent=1 // loop_header_branch
      %22 = sbr.rel (%p20) target = $region8
    $region5: #{tpu_custom_call.1} parent=1 // loop_body
      %s24 = ssub.s32 %s19, 1
      %s25 = ssub.s32 %s19, 2
      %s26 = sadd.s32 %s19, 1
      %s27 = ssub.s32 %s19, %s26
      %p28 = scmp.eq.s32.totalorder %s27, 0
      %s30 = sadd.s32 %s29, 1
      %s31 = scalar_select %p28, %s29, %s30
      %p34 = pneg %p28
      %p35 = scmp.eq.s32.totalorder %s19, 1
      %p36 = por %p34, %p35
      %p37 = scmp.ne.s32.totalorder %s29, %s32
      %p38 = scmp.eq.s32.totalorder %s19, 0
      %p39 = por %p37, %p38
      %p40 = scmp.ne.s32.totalorder %s29, %s32
      %p41 = scmp.eq.s32.totalorder %s24, 1
      %p42 = por %p40, %p41
      %p43 = scmp.ne.s32.totalorder %s32, %s33
      %p44 = scmp.eq.s32.totalorder %s24, 0
      %p45 = por %p43, %p44
      %p46 = scmp.ne.s32.totalorder %s32, %s33
      %p47 = scmp.eq.s32.totalorder %s25, 1
      %p48 = por %p46, %p47
      %p50 = scmp.ne.s32.totalorder %s33, %s49
      %p51 = scmp.eq.s32.totalorder %s25, 0
      %p52 = por %p50, %p51
      %s54 = sadd.s32 %s53, 1
      %p57 = scmp.eq.s32.totalorder %s19, 1
      %p58 = scmp.ne.s32.totalorder %s53, %s55
      %p59 = scmp.eq.s32.totalorder %s19, 0
      %p60 = por %p58, %p59
      %p61 = scmp.ne.s32.totalorder %s53, %s55
      %p62 = scmp.eq.s32.totalorder %s24, 1
      %p63 = por %p61, %p62
      %p64 = scmp.ne.s32.totalorder %s55, %s56
      %p65 = scmp.eq.s32.totalorder %s24, 0
      %p66 = por %p64, %p65
      %p67 = scmp.ne.s32.totalorder %s55, %s56
      %p68 = scmp.eq.s32.totalorder %s25, 1
      %p69 = por %p67, %p68
      %p71 = scmp.ne.s32.totalorder %s56, %s70
      %p72 = scmp.eq.s32.totalorder %s25, 0
      %p73 = por %p71, %p72
      %s75 = sadd.s32 %s74, 1
      %p78 = scmp.eq.s32.totalorder %s19, 1
      %p79 = scmp.ne.s32.totalorder %s74, %s76
      %p80 = scmp.eq.s32.totalorder %s19, 0
      %p81 = por %p79, %p80
      %p82 = scmp.ne.s32.totalorder %s74, %s76
      %p83 = scmp.eq.s32.totalorder %s24, 1
      %p84 = por %p82, %p83
      %p85 = scmp.ne.s32.totalorder %s76, %s77
      %p86 = scmp.eq.s32.totalorder %s24, 0
      %p87 = por %p85, %p86
      %p88 = scmp.ne.s32.totalorder %s76, %s77
      %p89 = scmp.eq.s32.totalorder %s25, 1
      %p90 = por %p88, %p89
      %p92 = scmp.ne.s32.totalorder %s77, %s91
      %p93 = scmp.eq.s32.totalorder %s25, 0
      %p94 = por %p92, %p93
      %s95 = ssub.s32 %s19, %s26
      %p96 = scmp.eq.s32.totalorder %s95, 0
      %s98 = sadd.s32 %s97, 1
      %s99 = scalar_select %p96, %s97, %s98
      %p102 = pneg %p96
      %p103 = scmp.eq.s32.totalorder %s19, 1
      %p104 = por %p102, %p103
      %p105 = scmp.ne.s32.totalorder %s97, %s100
      %p106 = scmp.eq.s32.totalorder %s19, 0
      %p107 = por %p105, %p106
      %p108 = scmp.ne.s32.totalorder %s97, %s100
      %p109 = scmp.eq.s32.totalorder %s24, 1
      %p110 = por %p108, %p109
      %p111 = scmp.ne.s32.totalorder %s100, %s101
      %p112 = scmp.eq.s32.totalorder %s24, 0
      %p113 = por %p111, %p112
      %p114 = scmp.ne.s32.totalorder %s100, %s101
      %p115 = scmp.eq.s32.totalorder %s25, 1
      %p116 = por %p114, %p115
      %p118 = scmp.ne.s32.totalorder %s101, %s117
      %p119 = scmp.eq.s32.totalorder %s25, 0
      %p120 = por %p118, %p119
      %s122 = sadd.s32 %s121, 1
      %p125 = scmp.eq.s32.totalorder %s19, 1
      %p126 = scmp.ne.s32.totalorder %s121, %s123
      %p127 = scmp.eq.s32.totalorder %s19, 0
      %p128 = por %p126, %p127
      %p129 = scmp.ne.s32.totalorder %s121, %s123
      %p130 = scmp.eq.s32.totalorder %s24, 1
      %p131 = por %p129, %p130
      %p132 = scmp.ne.s32.totalorder %s123, %s124
      %p133 = scmp.eq.s32.totalorder %s24, 0
      %p134 = por %p132, %p133
      %p135 = scmp.ne.s32.totalorder %s123, %s124
      %p136 = scmp.eq.s32.totalorder %s25, 1
      %p137 = por %p135, %p136
      %p139 = scmp.ne.s32.totalorder %s124, %s138
      %p140 = scmp.eq.s32.totalorder %s25, 0
      %p141 = por %p139, %p140
      %s143 = sadd.s32 %s142, 1
      %p146 = scmp.eq.s32.totalorder %s19, 1
      %p147 = scmp.ne.s32.totalorder %s142, %s144
      %p148 = scmp.eq.s32.totalorder %s19, 0
      %p149 = por %p147, %p148
      %p150 = scmp.ne.s32.totalorder %s142, %s144
      %p151 = scmp.eq.s32.totalorder %s24, 1
      %p152 = por %p150, %p151
      %p153 = scmp.ne.s32.totalorder %s144, %s145
      %p154 = scmp.eq.s32.totalorder %s24, 0
      %p155 = por %p153, %p154
      %p156 = scmp.ne.s32.totalorder %s144, %s145
      %p157 = scmp.eq.s32.totalorder %s25, 1
      %p158 = por %p156, %p157
      %p160 = scmp.ne.s32.totalorder %s145, %s159
      %p161 = scmp.eq.s32.totalorder %s25, 0
      %p162 = por %p160, %p161
      %s163 = ssub.s32 %s19, %s26
      %p164 = scmp.eq.s32.totalorder %s163, 0
      %s166 = sadd.s32 %s165, 1
      %s167 = scalar_select %p164, %s165, %s166
      %p170 = pneg %p164
      %p171 = scmp.eq.s32.totalorder %s19, 1
      %p172 = por %p170, %p171
      %p173 = scmp.ne.s32.totalorder %s165, %s168
      %p174 = scmp.eq.s32.totalorder %s19, 0
      %p175 = por %p173, %p174
      %p176 = scmp.ne.s32.totalorder %s165, %s168
      %p177 = scmp.eq.s32.totalorder %s24, 1
      %p178 = por %p176, %p177
      %p179 = scmp.ne.s32.totalorder %s168, %s169
      %p180 = scmp.eq.s32.totalorder %s24, 0
      %p181 = por %p179, %p180
      %p182 = scmp.ne.s32.totalorder %s168, %s169
      %p183 = scmp.eq.s32.totalorder %s25, 1
      %p184 = por %p182, %p183
      %p186 = scmp.ne.s32.totalorder %s169, %s185
      %p187 = scmp.eq.s32.totalorder %s25, 0
      %p188 = por %p186, %p187
      %p189 = scmp.le.s32.totalorder 1, %s19
      %p190 = scmp.lt.s32.totalorder %s19, 3
      %p191 = pnand %p189, %p190
      %p192 = pneg %p191
      // Predicated region
      $region9: #{tpu_custom_call.1} parent=5 // pred_check
        _
      $region10: #{tpu_custom_call.1} parent=5 // pred_check_branch
        %194 = sbr.rel (%p191) target = $region12
      $region11: #{tpu_custom_call.1} parent=5 // pred_region
        %s195 = ssub.s32 %s19, 1
        // Predicated region
        $region13: #{tpu_custom_call.1} parent=11 // pred_check
          %p196 = pneg %p66
        $region14: #{tpu_custom_call.1} parent=11 // pred_check_branch
          %198 = sbr.rel (%p196) target = $region16
        $region15: #{tpu_custom_call.1} parent=11 // pred_region
          %s200 = ssub.s32 8192, 8192
          %201 = vsyncadd [#allocation6], %s200
          %s202 = sshll.u32 [#allocation5], 4
          %s203 = int_to_ptr.vmem [resolvable:$true] %s202
          %208 = dma.hbm_to_vmem [thread:$0]  %s1, 8192, %s203, [#allocation6], 128, 128, 8
        $region16: #{tpu_custom_call.1} parent=11 // pred_fallthru
          _
        // Predicated region
        $region17: #{tpu_custom_call.1} parent=11 // pred_check
          %p209 = pneg %p87
        $region18: #{tpu_custom_call.1} parent=11 // pred_check_branch
          %211 = sbr.rel (%p209) target = $region20
        $region19: #{tpu_custom_call.1} parent=11 // pred_region
          _
        $region20: #{tpu_custom_call.1} parent=11 // pred_fallthru
          _
        // Predicated region
        $region21: #{tpu_custom_call.1} parent=11 // pred_check
          %p212 = pneg %p134
        $region22: #{tpu_custom_call.1} parent=11 // pred_check_branch
          %214 = sbr.rel (%p212) target = $region24
        $region23: #{tpu_custom_call.1} parent=11 // pred_region
          _
        $region24: #{tpu_custom_call.1} parent=11 // pred_fallthru
          _
        // Predicated region
        $region25: #{tpu_custom_call.1} parent=11 // pred_check
          %p215 = pneg %p155
        $region26: #{tpu_custom_call.1} parent=11 // pred_check_branch
          %217 = sbr.rel (%p215) target = $region28
        $region27: #{tpu_custom_call.1} parent=11 // pred_region
          _
        $region28: #{tpu_custom_call.1} parent=11 // pred_fallthru
          _
      $region12: #{tpu_custom_call.1} parent=5 // pred_fallthru
        _
      %p218 = scmp.lt.s32.totalorder %s19, 2
      // Predicated region
      $region29: #{tpu_custom_call.1} parent=5 // pred_check
        %p219 = pneg %p218
      $region30: #{tpu_custom_call.1} parent=5 // pred_check_branch
        %221 = sbr.rel (%p219) target = $region32
      $region31: #{tpu_custom_call.1} parent=5 // pred_region
        // Predicated region
        $region33: #{tpu_custom_call.1} parent=31 // pred_check
          %p222 = pneg %p39
        $region34: #{tpu_custom_call.1} parent=31 // pred_check_branch
          %224 = sbr.rel (%p222) target = $region36
        $region35: #{tpu_custom_call.1} parent=31 // pred_region
          %s225 = sand.u32 %s19, 1
          %s226 = scalar_lea.sflag [#allocation3], %s225
          %s227 = sand.u32 %s29, 1
          %s228 = smul.addr %s227, 32
          %s229 = scalar_lea.vmem [#allocation2], %s228
          %s231 = ssub.s32 512, 512
          %232 = vsyncadd %s226, %s231
          %s233 = smul.addr %s19, 4
          %s234 = smul.addr %s233, 128
          %s235 = scalar_lea.hbm %s0, %s234
          %s237 = sshll.u32 %s229, 4
          %s238 = int_to_ptr.vmem [resolvable:$true] %s237
          %240 = dma.hbm_to_vmem [thread:$0]  %s235, 512, %s238, %s226
        $region36: #{tpu_custom_call.1} parent=31 // pred_fallthru
          _
        // Predicated region
        $region37: #{tpu_custom_call.1} parent=31 // pred_check
          %p241 = pneg %p107
        $region38: #{tpu_custom_call.1} parent=31 // pred_check_branch
          %243 = sbr.rel (%p241) target = $region40
        $region39: #{tpu_custom_call.1} parent=31 // pred_region
          %s244 = sand.u32 %s19, 1
          %s245 = scalar_lea.sflag [#allocation3], %s244
          %s246 = sand.u32 %s97, 1
          %s247 = smul.addr %s246, 16
          %s248 = scalar_lea.vmem [#allocation7], %s247
          %s250 = ssub.s32 256, 256
          %251 = vsyncadd %s245, %s250
          %s252 = smul.addr %s19, 2
          %s253 = smul.addr %s252, 128
          %s254 = scalar_lea.hbm %s3, %s253
          %s256 = sshll.u32 %s248, 4
          %s257 = int_to_ptr.vmem [resolvable:$true] %s256
          %259 = dma.hbm_to_vmem [thread:$0]  %s254, 256, %s257, %s245
        $region40: #{tpu_custom_call.1} parent=31 // pred_fallthru
          _
      $region32: #{tpu_custom_call.1} parent=5 // pred_fallthru
        _
      %p260 = scmp.le.s32.totalorder 1, %s19
      %p261 = scmp.lt.s32.totalorder %s19, 3
      %p262 = pnand %p260, %p261
      %p263 = pneg %p262
      // Predicated region
      $region41: #{tpu_custom_call.1} parent=5 // pred_check
        _
      $region42: #{tpu_custom_call.1} parent=5 // pred_check_branch
        %265 = sbr.rel (%p262) target = $region44
      $region43: #{tpu_custom_call.1} parent=5 // pred_region
        %s266 = ssub.s32 %s19, 1
        %s267 = sand.u32 %s24, 1
        %s268 = scalar_lea.sflag [#allocation3], %s267
        %s269 = sand.u32 %s32, 1
        %s270 = smul.addr %s269, 32
        %s271 = scalar_lea.vmem [#allocation2], %s270
        // Predicated region
        $region45: #{tpu_custom_call.1} parent=43 // pred_check
          %p272 = pneg %p45
        $region46: #{tpu_custom_call.1} parent=43 // pred_check_branch
          %274 = sbr.rel (%p272) target = $region48
        $region47: #{tpu_custom_call.1} parent=43 // pred_region
          %275 = dma.done %s268, 512
        $region48: #{tpu_custom_call.1} parent=43 // pred_fallthru
          _
        // Predicated region
        $region49: #{tpu_custom_call.1} parent=43 // pred_check
          %p276 = pneg %p66
        $region50: #{tpu_custom_call.1} parent=43 // pred_check_branch
          %278 = sbr.rel (%p276) target = $region52
        $region51: #{tpu_custom_call.1} parent=43 // pred_region
          %279 = dma.done [#allocation6], 8192
        $region52: #{tpu_custom_call.1} parent=43 // pred_fallthru
          _
        %s280 = sand.u32 %s24, 1
        %s281 = scalar_lea.sflag [#allocation3], %s280
        %s282 = sand.u32 %s100, 1
        %s283 = smul.addr %s282, 16
        %s284 = scalar_lea.vmem [#allocation7], %s283
        // Predicated region
        $region53: #{tpu_custom_call.1} parent=43 // pred_check
          %p285 = pneg %p113
        $region54: #{tpu_custom_call.1} parent=43 // pred_check_branch
          %287 = sbr.rel (%p285) target = $region56
        $region55: #{tpu_custom_call.1} parent=43 // pred_region
          %288 = dma.done %s281, 256
        $region56: #{tpu_custom_call.1} parent=43 // pred_fallthru
          _
        %s289 = sand.u32 %s24, 1
        %s290 = scalar_lea.sflag [#allocation3], %s289
        %s291 = sand.u32 %s32, 1
        %s292 = smul.addr %s291, 32
        %s293 = scalar_lea.vmem [#allocation2], %s292
        %p294 = pneg %p45
        %p295 = pneg %p42
        %p296 = pneg %p66
        %p297 = pneg %p63
        %p298 = pneg %p87
        %p299 = pneg %p84
        %s300 = sand.u32 %s24, 1
        %s301 = scalar_lea.sflag [#allocation3], %s300
        %s302 = sand.u32 %s100, 1
        %s303 = smul.addr %s302, 16
        %s304 = scalar_lea.vmem [#allocation7], %s303
        %p305 = pneg %p113
        %p306 = pneg %p110
        %p307 = pneg %p134
        %p308 = pneg %p131
        %p309 = pneg %p155
        %p310 = pneg %p152
        %p311 = pneg %p181
        %p312 = pneg %p178
        %s313 = sand.u32 %s168, 1
        %s314 = scalar_lea.sflag [#allocation4], %s313
        %s315 = sand.u32 %s168, 1
        %s316 = smul.addr %s315, 16
        %s317 = scalar_lea.vmem [#allocation8], %s316
        %v318 = vld [vmem:[%s271] sm:$0xff]
        %v319 = vld [vmem:[%s271 + $0x8] sm:$0xff]
        %v320 = vld [vmem:[%s271 + $0x10] sm:$0xff]
        %v321 = vld [vmem:[%s271 + $0x18] sm:$0xff]
        %v322 = vpack.c.bf16 %v318, %v318
        %v323 = vpack.c.bf16 %v319, %v319
        %v324 = vpack.c.bf16 %v320, %v320
        %v325 = vpack.c.bf16 %v321, %v321
        %v326 = vld [vmem:[#allocation5] sm:$0xff]
        %v327 = vld [vmem:[#allocation5 + $0x8] sm:$0xff]
        %v328 = vld [vmem:[#allocation5 + $0x10] sm:$0xff]
        %v329 = vld [vmem:[#allocation5 + $0x18] sm:$0xff]
        %v330 = vld [vmem:[#allocation5 + $0x20] sm:$0xff]
        %v331 = vld [vmem:[#allocation5 + $0x28] sm:$0xff]
        %v332 = vld [vmem:[#allocation5 + $0x30] sm:$0xff]
        %v333 = vld [vmem:[#allocation5 + $0x38] sm:$0xff]
        %v334 = vld [vmem:[#allocation5 + $0x40] sm:$0xff]
        %v335 = vld [vmem:[#allocation5 + $0x48] sm:$0xff]
        %v336 = vld [vmem:[#allocation5 + $0x50] sm:$0xff]
        %v337 = vld [vmem:[#allocation5 + $0x58] sm:$0xff]
        %v338 = vld [vmem:[#allocation5 + $0x60] sm:$0xff]
        %v339 = vld [vmem:[#allocation5 + $0x68] sm:$0xff]
        %v340 = vld [vmem:[#allocation5 + $0x70] sm:$0xff]
        %v341 = vld [vmem:[#allocation5 + $0x78] sm:$0xff]
        %v342 = vld [vmem:[#allocation5 + $0x80] sm:$0xff]
        %v343 = vld [vmem:[#allocation5 + $0x88] sm:$0xff]
        %v344 = vld [vmem:[#allocation5 + $0x90] sm:$0xff]
        %v345 = vld [vmem:[#allocation5 + $0x98] sm:$0xff]
        %v346 = vld [vmem:[#allocation5 + $0xa0] sm:$0xff]
        %v347 = vld [vmem:[#allocation5 + $0xa8] sm:$0xff]
        %v348 = vld [vmem:[#allocation5 + $0xb0] sm:$0xff]
        %v349 = vld [vmem:[#allocation5 + $0xb8] sm:$0xff]
        %v350 = vld [vmem:[#allocation5 + $0xc0] sm:$0xff]
        %v351 = vld [vmem:[#allocation5 + $0xc8] sm:$0xff]
        %v352 = vld [vmem:[#allocation5 + $0xd0] sm:$0xff]
        %v353 = vld [vmem:[#allocation5 + $0xd8] sm:$0xff]
        %v354 = vld [vmem:[#allocation5 + $0xe0] sm:$0xff]
        %v355 = vld [vmem:[#allocation5 + $0xe8] sm:$0xff]
        %v356 = vld [vmem:[#allocation5 + $0xf0] sm:$0xff]
        %v357 = vld [vmem:[#allocation5 + $0xf8] sm:$0xff]
        %v358 = vld [vmem:[#allocation5 + $0x100] sm:$0xff]
        %v359 = vld [vmem:[#allocation5 + $0x108] sm:$0xff]
        %v360 = vld [vmem:[#allocation5 + $0x110] sm:$0xff]
        %v361 = vld [vmem:[#allocation5 + $0x118] sm:$0xff]
        %v362 = vld [vmem:[#allocation5 + $0x120] sm:$0xff]
        %v363 = vld [vmem:[#allocation5 + $0x128] sm:$0xff]
        %v364 = vld [vmem:[#allocation5 + $0x130] sm:$0xff]
        %v365 = vld [vmem:[#allocation5 + $0x138] sm:$0xff]
        %v366 = vld [vmem:[#allocation5 + $0x140] sm:$0xff]
        %v367 = vld [vmem:[#allocation5 + $0x148] sm:$0xff]
        %v368 = vld [vmem:[#allocation5 + $0x150] sm:$0xff]
        %v369 = vld [vmem:[#allocation5 + $0x158] sm:$0xff]
        %v370 = vld [vmem:[#allocation5 + $0x160] sm:$0xff]
        %v371 = vld [vmem:[#allocation5 + $0x168] sm:$0xff]
        %v372 = vld [vmem:[#allocation5 + $0x170] sm:$0xff]
        %v373 = vld [vmem:[#allocation5 + $0x178] sm:$0xff]
        %v374 = vld [vmem:[#allocation5 + $0x180] sm:$0xff]
        %v375 = vld [vmem:[#allocation5 + $0x188] sm:$0xff]
        %v376 = vld [vmem:[#allocation5 + $0x190] sm:$0xff]
        %v377 = vld [vmem:[#allocation5 + $0x198] sm:$0xff]
        %v378 = vld [vmem:[#allocation5 + $0x1a0] sm:$0xff]
        %v379 = vld [vmem:[#allocation5 + $0x1a8] sm:$0xff]
        %v380 = vld [vmem:[#allocation5 + $0x1b0] sm:$0xff]
        %v381 = vld [vmem:[#allocation5 + $0x1b8] sm:$0xff]
        %v382 = vld [vmem:[#allocation5 + $0x1c0] sm:$0xff]
        %v383 = vld [vmem:[#allocation5 + $0x1c8] sm:$0xff]
        %v384 = vld [vmem:[#allocation5 + $0x1d0] sm:$0xff]
        %v385 = vld [vmem:[#allocation5 + $0x1d8] sm:$0xff]
        %v386 = vld [vmem:[#allocation5 + $0x1e0] sm:$0xff]
        %v387 = vld [vmem:[#allocation5 + $0x1e8] sm:$0xff]
        %v388 = vld [vmem:[#allocation5 + $0x1f0] sm:$0xff]
        %v389 = vld [vmem:[#allocation5 + $0x1f8] sm:$0xff]
        %v390 = vld [vmem:[%s2] sm:$0x3]
        %v392 = vlaneseq
        %v393 = vshrl.u32 %v392, 7
        %v394 = vsub.s32 0, %v393
        %v395 = vrot.slane %v390, %v394
        %v396 = vlaneseq
        %v397 = vshrl.u32 %v396, 7
        %v398 = vsub.s32 1, %v397
        %v399 = vrot.slane %v390, %v398
        %v466 = vunpack.c.l.b16 %v326
        %v467 = vunpack.c.h.b16 %v326
        %v468 = vunpack.c.l.b16 %v327
        %v469 = vunpack.c.h.b16 %v327
        %v470 = vunpack.c.l.b16 %v328
        %v471 = vunpack.c.h.b16 %v328
        %v472 = vunpack.c.l.b16 %v329
        %v473 = vunpack.c.h.b16 %v329
        %v474 = vunpack.c.l.b16 %v330
        %v475 = vunpack.c.h.b16 %v330
        %v476 = vunpack.c.l.b16 %v331
        %v477 = vunpack.c.h.b16 %v331
        %v478 = vunpack.c.l.b16 %v332
        %v479 = vunpack.c.h.b16 %v332
        %v480 = vunpack.c.l.b16 %v333
        %v481 = vunpack.c.h.b16 %v333
        %v482 = vunpack.c.l.b16 %v334
        %v483 = vunpack.c.h.b16 %v334
        %v484 = vunpack.c.l.b16 %v335
        %v485 = vunpack.c.h.b16 %v335
        %v486 = vunpack.c.l.b16 %v336
        %v487 = vunpack.c.h.b16 %v336
        %v488 = vunpack.c.l.b16 %v337
        %v489 = vunpack.c.h.b16 %v337
        %v490 = vunpack.c.l.b16 %v338
        %v491 = vunpack.c.h.b16 %v338
        %v492 = vunpack.c.l.b16 %v339
        %v493 = vunpack.c.h.b16 %v339
        %v494 = vunpack.c.l.b16 %v340
        %v495 = vunpack.c.h.b16 %v340
        %v496 = vunpack.c.l.b16 %v341
        %v497 = vunpack.c.h.b16 %v341
        %v498 = vunpack.c.l.b16 %v342
        %v499 = vunpack.c.h.b16 %v342
        %v500 = vunpack.c.l.b16 %v343
        %v501 = vunpack.c.h.b16 %v343
        %v502 = vunpack.c.l.b16 %v344
        %v503 = vunpack.c.h.b16 %v344
        %v504 = vunpack.c.l.b16 %v345
        %v505 = vunpack.c.h.b16 %v345
        %v506 = vunpack.c.l.b16 %v346
        %v507 = vunpack.c.h.b16 %v346
        %v508 = vunpack.c.l.b16 %v347
        %v509 = vunpack.c.h.b16 %v347
        %v510 = vunpack.c.l.b16 %v348
        %v511 = vunpack.c.h.b16 %v348
        %v512 = vunpack.c.l.b16 %v349
        %v513 = vunpack.c.h.b16 %v349
        %v514 = vunpack.c.l.b16 %v350
        %v515 = vunpack.c.h.b16 %v350
        %v516 = vunpack.c.l.b16 %v351
        %v517 = vunpack.c.h.b16 %v351
        %v518 = vunpack.c.l.b16 %v352
        %v519 = vunpack.c.h.b16 %v352
        %v520 = vunpack.c.l.b16 %v353
        %v521 = vunpack.c.h.b16 %v353
        %v522 = vunpack.c.l.b16 %v354
        %v523 = vunpack.c.h.b16 %v354
        %v524 = vunpack.c.l.b16 %v355
        %v525 = vunpack.c.h.b16 %v355
        %v526 = vunpack.c.l.b16 %v356
        %v527 = vunpack.c.h.b16 %v356
        %v528 = vunpack.c.l.b16 %v357
        %v529 = vunpack.c.h.b16 %v357
        %v530 = vunpack.c.l.b16 %v358
        %v531 = vunpack.c.h.b16 %v358
        %v532 = vunpack.c.l.b16 %v359
        %v533 = vunpack.c.h.b16 %v359
        %v534 = vunpack.c.l.b16 %v360
        %v535 = vunpack.c.h.b16 %v360
        %v536 = vunpack.c.l.b16 %v361
        %v537 = vunpack.c.h.b16 %v361
        %v538 = vunpack.c.l.b16 %v362
        %v539 = vunpack.c.h.b16 %v362
        %v540 = vunpack.c.l.b16 %v363
        %v541 = vunpack.c.h.b16 %v363
        %v542 = vunpack.c.l.b16 %v364
        %v543 = vunpack.c.h.b16 %v364
        %v544 = vunpack.c.l.b16 %v365
        %v545 = vunpack.c.h.b16 %v365
        %v546 = vunpack.c.l.b16 %v366
        %v547 = vunpack.c.h.b16 %v366
        %v548 = vunpack.c.l.b16 %v367
        %v549 = vunpack.c.h.b16 %v367
        %v550 = vunpack.c.l.b16 %v368
        %v551 = vunpack.c.h.b16 %v368
        %v552 = vunpack.c.l.b16 %v369
        %v553 = vunpack.c.h.b16 %v369
        %v554 = vunpack.c.l.b16 %v370
        %v555 = vunpack.c.h.b16 %v370
        %v556 = vunpack.c.l.b16 %v371
        %v557 = vunpack.c.h.b16 %v371
        %v558 = vunpack.c.l.b16 %v372
        %v559 = vunpack.c.h.b16 %v372
        %v560 = vunpack.c.l.b16 %v373
        %v561 = vunpack.c.h.b16 %v373
        %v562 = vunpack.c.l.b16 %v374
        %v563 = vunpack.c.h.b16 %v374
        %v564 = vunpack.c.l.b16 %v375
        %v565 = vunpack.c.h.b16 %v375
        %v566 = vunpack.c.l.b16 %v376
        %v567 = vunpack.c.h.b16 %v376
        %v568 = vunpack.c.l.b16 %v377
        %v569 = vunpack.c.h.b16 %v377
        %v570 = vunpack.c.l.b16 %v378
        %v571 = vunpack.c.h.b16 %v378
        %v572 = vunpack.c.l.b16 %v379
        %v573 = vunpack.c.h.b16 %v379
        %v574 = vunpack.c.l.b16 %v380
        %v575 = vunpack.c.h.b16 %v380
        %v576 = vunpack.c.l.b16 %v381
        %v577 = vunpack.c.h.b16 %v381
        %v578 = vunpack.c.l.b16 %v382
        %v579 = vunpack.c.h.b16 %v382
        %v580 = vunpack.c.l.b16 %v383
        %v581 = vunpack.c.h.b16 %v383
        %v582 = vunpack.c.l.b16 %v384
        %v583 = vunpack.c.h.b16 %v384
        %v584 = vunpack.c.l.b16 %v385
        %v585 = vunpack.c.h.b16 %v385
        %v586 = vunpack.c.l.b16 %v386
        %v587 = vunpack.c.h.b16 %v386
        %v588 = vunpack.c.l.b16 %v387
        %v589 = vunpack.c.h.b16 %v387
        %v590 = vunpack.c.l.b16 %v388
        %v591 = vunpack.c.h.b16 %v388
        %v592 = vunpack.c.l.b16 %v389
        %v593 = vunpack.c.h.b16 %v389
        %v594 = vpack.c.b16 %v468, %v466
        %v595 = vpack.c.b16 %v469, %v467
        %v596 = vpack.c.b16 %v472, %v470
        %v597 = vpack.c.b16 %v473, %v471
        %v598 = vpack.c.b16 %v476, %v474
        %v599 = vpack.c.b16 %v477, %v475
        %v600 = vpack.c.b16 %v480, %v478
        %v601 = vpack.c.b16 %v481, %v479
        %v602 = vpack.c.b16 %v484, %v482
        %v603 = vpack.c.b16 %v485, %v483
        %v604 = vpack.c.b16 %v488, %v486
        %v605 = vpack.c.b16 %v489, %v487
        %v606 = vpack.c.b16 %v492, %v490
        %v607 = vpack.c.b16 %v493, %v491
        %v608 = vpack.c.b16 %v496, %v494
        %v609 = vpack.c.b16 %v497, %v495
        %v610 = vpack.c.b16 %v500, %v498
        %v611 = vpack.c.b16 %v501, %v499
        %v612 = vpack.c.b16 %v504, %v502
        %v613 = vpack.c.b16 %v505, %v503
        %v614 = vpack.c.b16 %v508, %v506
        %v615 = vpack.c.b16 %v509, %v507
        %v616 = vpack.c.b16 %v512, %v510
        %v617 = vpack.c.b16 %v513, %v511
        %v618 = vpack.c.b16 %v516, %v514
        %v619 = vpack.c.b16 %v517, %v515
        %v620 = vpack.c.b16 %v520, %v518
        %v621 = vpack.c.b16 %v521, %v519
        %v622 = vpack.c.b16 %v524, %v522
        %v623 = vpack.c.b16 %v525, %v523
        %v624 = vpack.c.b16 %v528, %v526
        %v625 = vpack.c.b16 %v529, %v527
        %v626 = vpack.c.b16 %v532, %v530
        %v627 = vpack.c.b16 %v533, %v531
        %v628 = vpack.c.b16 %v536, %v534
        %v629 = vpack.c.b16 %v537, %v535
        %v630 = vpack.c.b16 %v540, %v538
        %v631 = vpack.c.b16 %v541, %v539
        %v632 = vpack.c.b16 %v544, %v542
        %v633 = vpack.c.b16 %v545, %v543
        %v634 = vpack.c.b16 %v548, %v546
        %v635 = vpack.c.b16 %v549, %v547
        %v636 = vpack.c.b16 %v552, %v550
        %v637 = vpack.c.b16 %v553, %v551
        %v638 = vpack.c.b16 %v556, %v554
        %v639 = vpack.c.b16 %v557, %v555
        %v640 = vpack.c.b16 %v560, %v558
        %v641 = vpack.c.b16 %v561, %v559
        %v642 = vpack.c.b16 %v564, %v562
        %v643 = vpack.c.b16 %v565, %v563
        %v644 = vpack.c.b16 %v568, %v566
        %v645 = vpack.c.b16 %v569, %v567
        %v646 = vpack.c.b16 %v572, %v570
        %v647 = vpack.c.b16 %v573, %v571
        %v648 = vpack.c.b16 %v576, %v574
        %v649 = vpack.c.b16 %v577, %v575
        %v650 = vpack.c.b16 %v580, %v578
        %v651 = vpack.c.b16 %v581, %v579
        %v652 = vpack.c.b16 %v584, %v582
        %v653 = vpack.c.b16 %v585, %v583
        %v654 = vpack.c.b16 %v588, %v586
        %v655 = vpack.c.b16 %v589, %v587
        %v656 = vpack.c.b16 %v592, %v590
        %v657 = vpack.c.b16 %v593, %v591
        %722 = vmatprep.subr.bf16.mxu0 %v609
        %723 = vmatpush1.bf16.msra.mxu0 %v608
        %724 = vmatprep.subr.bf16.mxu0 %v607
        %725 = vmatpush1.bf16.msra.mxu0 %v606
        %726 = vmatprep.subr.bf16.mxu0 %v605
        %727 = vmatpush1.bf16.msra.mxu0 %v604
        %728 = vmatprep.subr.bf16.mxu0 %v603
        %729 = vmatpush1.bf16.msra.mxu0 %v602
        %730 = vmatprep.subr.bf16.mxu0 %v601
        %731 = vmatpush1.bf16.msra.mxu0 %v600
        %732 = vmatprep.subr.bf16.mxu0 %v599
        %733 = vmatpush1.bf16.msra.mxu0 %v598
        %734 = vmatprep.subr.bf16.mxu0 %v597
        %735 = vmatpush1.bf16.msra.mxu0 %v596
        %736 = vmatprep.subr.bf16.mxu0 %v595
        %737 = vmatpush1.bf16.msra.mxu0 %v594
        %738 = vmatprep.subr.bf16.mxu0 %v625
        %739 = vmatpush2.bf16.msra.mxu0 %v624
        %740 = vmatprep.subr.bf16.mxu0 %v623
        %741 = vmatpush2.bf16.msra.mxu0 %v622
        %742 = vmatprep.subr.bf16.mxu0 %v621
        %743 = vmatpush2.bf16.msra.mxu0 %v620
        %744 = vmatprep.subr.bf16.mxu0 %v619
        %745 = vmatpush2.bf16.msra.mxu0 %v618
        %746 = vmatprep.subr.bf16.mxu0 %v617
        %747 = vmatpush2.bf16.msra.mxu0 %v616
        %748 = vmatprep.subr.bf16.mxu0 %v615
        %749 = vmatpush2.bf16.msra.mxu0 %v614
        %750 = vmatprep.subr.bf16.mxu0 %v613
        %751 = vmatpush2.bf16.msra.mxu0 %v612
        %752 = vmatprep.subr.bf16.mxu0 %v611
        %753 = vmatpush2.bf16.msra.mxu0 %v610
        %754 = vmatprep.mubr.bf16.mxu0 %v323
        %755 = vmatmul.mubr.bf16.gmra.mxu0 %v322
        %v756 = vpop.f32.mrf.mxu0
        %v757 = vadd.f32 %v395, %v756
        %v758 = vpop.f32.mrf.mxu0
        %v759 = vadd.f32 %v399, %v758
        %v760 = vpop.f32.mrf.mxu0
        %v761 = vpop.f32.mrf.mxu0
        %762 = vdwg.mxu0
        %763 = vmatprep.subr.bf16.mxu0 %v641
        %764 = vmatpush1.bf16.msra.mxu0 %v640
        %765 = vmatprep.subr.bf16.mxu0 %v639
        %766 = vmatpush1.bf16.msra.mxu0 %v638
        %767 = vmatprep.subr.bf16.mxu0 %v637
        %768 = vmatpush1.bf16.msra.mxu0 %v636
        %769 = vmatprep.subr.bf16.mxu0 %v635
        %770 = vmatpush1.bf16.msra.mxu0 %v634
        %771 = vmatprep.subr.bf16.mxu0 %v633
        %772 = vmatpush1.bf16.msra.mxu0 %v632
        %773 = vmatprep.subr.bf16.mxu0 %v631
        %774 = vmatpush1.bf16.msra.mxu0 %v630
        %775 = vmatprep.subr.bf16.mxu0 %v629
        %776 = vmatpush1.bf16.msra.mxu0 %v628
        %777 = vmatprep.subr.bf16.mxu0 %v627
        %778 = vmatpush1.bf16.msra.mxu0 %v626
        %779 = vmatprep.subr.bf16.mxu0 %v657
        %780 = vmatpush2.bf16.msra.mxu0 %v656
        %781 = vmatprep.subr.bf16.mxu0 %v655
        %782 = vmatpush2.bf16.msra.mxu0 %v654
        %783 = vmatprep.subr.bf16.mxu0 %v653
        %784 = vmatpush2.bf16.msra.mxu0 %v652
        %785 = vmatprep.subr.bf16.mxu0 %v651
        %786 = vmatpush2.bf16.msra.mxu0 %v650
        %787 = vmatprep.subr.bf16.mxu0 %v649
        %788 = vmatpush2.bf16.msra.mxu0 %v648
        %789 = vmatprep.subr.bf16.mxu0 %v647
        %790 = vmatpush2.bf16.msra.mxu0 %v646
        %791 = vmatprep.subr.bf16.mxu0 %v645
        %792 = vmatpush2.bf16.msra.mxu0 %v644
        %793 = vmatprep.subr.bf16.mxu0 %v643
        %794 = vmatpush2.bf16.msra.mxu0 %v642
        %795 = vmatprep.mubr.bf16.mxu0 %v325
        %796 = vmatmul.mubr.bf16.gmra.mxu0 %v324
        %v797 = vpop.f32.mrf.mxu0
        %v798 = vadd.f32 %v757, %v797
        %v799 = vpop.f32.mrf.mxu0
        %v800 = vadd.f32 %v759, %v799
        %v801 = vpop.f32.mrf.mxu0
        %v802 = vpop.f32.mrf.mxu0
        %803 = vdwg.mxu0
        %v804 = vld [vmem:[%s284] sm:$0xff]
        %v805 = vld [vmem:[%s284 + $0x8] sm:$0xff]
        %v806 = vadd.f32 %v798, %v804
        %v807 = vadd.f32 %v800, %v805
        %v808 = vadd.f32 %v806, %v807
        %809 = vadd.xlane.f32.xlu0 %v808
        %v810 = vpop.xlane.xlu0 %809
        %v811 = vrcp.pop 256.0
        %v812 = vmul.f32 %v810, %v811
        %v813 = vsub.f32 %v806, %v812
        %v814 = vsub.f32 %v807, %v812
        %v815 = vmul.f32 %v813, %v813
        %v816 = vmul.f32 %v814, %v814
        %v817 = vadd.f32 %v815, %v816
        %818 = vadd.xlane.f32.xlu0 %v817
        %v819 = vpop.xlane.xlu0 %818
        %v820 = vmul.f32 %v819, %v811
        %v821 = vadd.f32 %v820, 1e-12
        %v822 = vrsqrt.pop %v821
        %v823 = vmul.f32 %v813, %v822
        %v824 = vmul.f32 %v814, %v822
        %v825 = vld [vmem:[%s4] sm:$0x3]
        %v827 = vlaneseq
        %v828 = vshrl.u32 %v827, 7
        %v829 = vsub.s32 0, %v828
        %v830 = vrot.slane %v825, %v829
        %v831 = vlaneseq
        %v832 = vshrl.u32 %v831, 7
        %v833 = vsub.s32 1, %v832
        %v834 = vrot.slane %v825, %v833
        %v837 = vmul.f32 %v823, %v830
        %v838 = vmul.f32 %v824, %v834
        %v839 = vld [vmem:[%s5] sm:$0x3]
        %v841 = vlaneseq
        %v842 = vshrl.u32 %v841, 7
        %v843 = vsub.s32 0, %v842
        %v844 = vrot.slane %v839, %v843
        %v845 = vlaneseq
        %v846 = vshrl.u32 %v845, 7
        %v847 = vsub.s32 1, %v846
        %v848 = vrot.slane %v839, %v847
        %v851 = vadd.f32 %v837, %v844
        %v852 = vadd.f32 %v838, %v848
        %853 = vst [vmem:[%s317] sm:$0xff] %v851
        %854 = vst [vmem:[%s317 + $0x8] sm:$0xff] %v852
        %s855 = sand.u32 %s168, 1
        %s856 = scalar_lea.sflag [#allocation4], %s855
        %s857 = sand.u32 %s168, 1
        %s858 = smul.addr %s857, 16
        %s859 = scalar_lea.vmem [#allocation8], %s858
        // Predicated region
        $region57: #{tpu_custom_call.1} parent=43 // pred_check
          %p860 = pneg %p178
        $region58: #{tpu_custom_call.1} parent=43 // pred_check_branch
          %862 = sbr.rel (%p860) target = $region60
        $region59: #{tpu_custom_call.1} parent=43 // pred_region
          %s864 = ssub.s32 256, 256
          %865 = vsyncadd %s856, %s864
          %s866 = smul.addr %s24, 2
          %s867 = smul.addr %s866, 128
          %s868 = scalar_lea.hbm %s6, %s867
          %s870 = sshll.u32 %s859, 4
          %s871 = int_to_ptr.vmem [resolvable:$true] %s870
          %873 = dma.vmem_to_hbm [thread:$0]  %s871, 256, %s868, %s856
        $region60: #{tpu_custom_call.1} parent=43 // pred_fallthru
          _
      $region44: #{tpu_custom_call.1} parent=5 // pred_fallthru
        _
      %p874 = scmp.le.s32.totalorder 2, %s19
      // Predicated region
      $region61: #{tpu_custom_call.1} parent=5 // pred_check
        %p875 = pneg %p874
      $region62: #{tpu_custom_call.1} parent=5 // pred_check_branch
        %877 = sbr.rel (%p875) target = $region64
      $region63: #{tpu_custom_call.1} parent=5 // pred_region
        %s878 = ssub.s32 %s19, 2
        // Predicated region
        $region65: #{tpu_custom_call.1} parent=63 // pred_check
          %p879 = pneg %p184
        $region66: #{tpu_custom_call.1} parent=63 // pred_check_branch
          %881 = sbr.rel (%p879) target = $region68
        $region67: #{tpu_custom_call.1} parent=63 // pred_region
          %s882 = sand.u32 %s169, 1
          %s883 = scalar_lea.sflag [#allocation4], %s882
          %s884 = sand.u32 %s169, 1
          %s885 = smul.addr %s884, 16
          %s886 = scalar_lea.vmem [#allocation8], %s885
          %887 = dma.done %s883, 256
        $region68: #{tpu_custom_call.1} parent=63 // pred_fallthru
          _
      $region64: #{tpu_custom_call.1} parent=5 // pred_fallthru
        _
    $region6: #{tpu_custom_call.1} parent=1 // loop_footer
      %s23 = sadd.s32 1, %s19
    $region7: #{tpu_custom_call.1} parent=1 // loop_footer_branch
      %18 = sbr.rel target = $region3
    $region8: #{tpu_custom_call.1} parent=1 // loop_exit
      _
    %888 = vsyncpa [#allocation3], 1
    %s889 = scalar_lea.sflag [#allocation3], 1
    %890 = vsyncpa %s889, 1
    %891 = vsyncpa [#allocation6], 1
    %892 = vsyncpa [#allocation4], 1
    %s893 = scalar_lea.sflag [#allocation4], 1
    %894 = vsyncpa %s893, 1

</llo_original>
